<compile_context>
chip_gen: v7x
topology: tpu7x:2x2x1
jax: 0.10.0
libtpu: 0.0.40
codegen_flags: <defaults>
</compile_context>

<pallas_src>
import functools
import math

import jax
import jax.numpy as jnp
from jax.experimental import pallas as pl
from jax.experimental.pallas import tpu as pltpu


def _sdpa_dropout_kernel(q_ref, k_ref, v_ref, u_ref, o_ref, *,
                         inv_scale, dropout_p):
    # Blocks: q (G, Sq, D), k (G, Sk, D), v (G, Sk, Dv), u (G, Sq, Sk),
    #         o (G, Sq, Dv).  One grid step handles G (batch*head) slices.
    q = q_ref[...]
    k = k_ref[...]
    v = v_ref[...]

    # Fold the 1/scale_factor into q: O(S*D) instead of O(S^2).
    q = q * jnp.asarray(inv_scale, dtype=q.dtype)

    # scores = q @ k^T, contracted on D, batched over G; f32 accumulation.
    s = jnp.einsum("gqd,gkd->gqk", q, k, preferred_element_type=jnp.float32)

    # Numerically-stable softmax numerator; normalization deferred past @ v.
    m = jnp.max(s, axis=-1, keepdims=True)
    e = jnp.exp(s - m)
    denom = jnp.sum(e, axis=-1, keepdims=True)

    post_scale = 1.0
    if dropout_p > 0.0:  # compile-time branch (dropout_p is static)
        keep = u_ref[...] >= jnp.float32(dropout_p)      # P(keep) = 1 - p
        e = jnp.where(keep, e, jnp.zeros_like(e))
        post_scale = 1.0 / (1.0 - dropout_p)

    # out = dropout(softmax(qk/scale)) @ v, with the row-wise 1/denom and the
    # dropout rescale applied once on the (S, Dv)-sized result.
    p = e.astype(v.dtype)
    out = jnp.einsum("gqk,gkd->gqd", p, v, preferred_element_type=jnp.float32)
    out = out * (post_scale / denom)
    o_ref[...] = out.astype(o_ref.dtype)


def _pick_group(bh, per_slice_bytes, budget_bytes):
    """Largest divisor of bh whose working set fits the VMEM budget."""
    for g in range(bh, 0, -1):
        if bh % g == 0 and g * per_slice_bytes <= budget_bytes:
            return g
    return 1


def sdpa_dropout(q, k, v, scale_factor, d_k, dropout_p=0.1, *, seed=0):
    """Mirrors Model.forward(q, k, v, scale_factor, d_k, dropout_p)."""
    del d_k  # unused by the reference forward pass

    *lead, Sq, D = q.shape
    Sk = k.shape[-2]
    Dv = v.shape[-1]
    BH = math.prod(lead) if lead else 1

    dropout_p = float(dropout_p)
    if dropout_p >= 1.0:
        # torch.nn.functional.dropout with p == 1 zeroes the whole tensor.
        return jnp.zeros((*lead, Sq, Dv), dtype=q.dtype)

    q3 = q.reshape(BH, Sq, D)
    k3 = k.reshape(BH, Sk, D)
    v3 = v.reshape(BH, Sk, Dv)

    # Host-generated uniforms drive the dropout mask (deterministic per seed).
    if dropout_p > 0.0:
        u = jax.random.uniform(jax.random.PRNGKey(seed), (BH, Sq, Sk),
                               dtype=jnp.float32)
    else:
        u = jnp.ones((BH, Sq, Sk), dtype=jnp.float32)

    # Group several (batch, head) slices per grid step: fills (8,128) vreg
    # tiles at small S/D and amortizes the ~0.35 us per-step overhead, while
    # staying comfortably inside per-core VMEM on v5e/v6e/v7x.
    itemsize = jnp.dtype(q.dtype).itemsize
    per_slice = (
        2 * itemsize * (Sq * D + Sk * D + Sk * Dv + Sq * Dv)  # dbl-buffered io
        + 2 * 4 * Sq * Sk                                     # dbl-buffered u
        + 3 * 4 * Sq * Sk                                     # s / e / keep
    )
    G = _pick_group(BH, per_slice, budget_bytes=24 * 1024 * 1024)

    kernel = functools.partial(
        _sdpa_dropout_kernel,
        inv_scale=1.0 / float(scale_factor),
        dropout_p=dropout_p,
    )

    out = pl.pallas_call(
        kernel,
        out_shape=jax.ShapeDtypeStruct((BH, Sq, Dv), q.dtype),
        grid=(BH // G,),
        in_specs=[
            pl.BlockSpec((G, Sq, D), lambda i: (i, 0, 0)),
            pl.BlockSpec((G, Sk, D), lambda i: (i, 0, 0)),
            pl.BlockSpec((G, Sk, Dv), lambda i: (i, 0, 0)),
            pl.BlockSpec((G, Sq, Sk), lambda i: (i, 0, 0)),
        ],
        out_specs=pl.BlockSpec((G, Sq, Dv), lambda i: (i, 0, 0)),
        compiler_params=pltpu.CompilerParams(
            dimension_semantics=("parallel",),
            vmem_limit_bytes=64 * 1024 * 1024,
        ),
    )(q3, k3, v3, u)

    return out.reshape(*lead, Sq, Dv)


if __name__ == "__main__":
    key = jax.random.PRNGKey(0)
    kq, kk, kv = jax.random.split(key, 3)

    # Small shapes consistent with the module's (batch, heads, seq, dim) usage.
    B, H, S, D = 2, 2, 8, 32
    q = jax.random.normal(kq, (B, H, S, D), dtype=jnp.float32)
    k = jax.random.normal(kk, (B, H, S, D), dtype=jnp.float32)
    v = jax.random.normal(kv, (B, H, S, D), dtype=jnp.float32)

    scale_factor = 1.0
    d_k = D

    # Sanity check against a pure-JAX reference with dropout disabled.
    out_nodrop = sdpa_dropout(q, k, v, scale_factor, d_k, dropout_p=0.0)
    ref = jnp.matmul(
        jax.nn.softmax(jnp.matmul(q, jnp.swapaxes(k, -1, -2)) / scale_factor,
                       axis=-1),
        v)
    assert jnp.allclose(out_nodrop, ref, rtol=1e-4, atol=1e-4)

    # Forward pass with dropout (training semantics, deterministic seed).
    out = sdpa_dropout(q, k, v, scale_factor, d_k, dropout_p=0.1, seed=0)
    jax.block_until_ready(out)

    assert out.shape == (B, H, S, D), out.shape
    assert bool(jnp.all(jnp.isfinite(out)))
    print("KERNEL_OK")
</pallas_src>

<mosaic_0001>
module attributes {stable_mosaic.version = 11 : i64} {
  func.func @_sdpa_dropout_kernel(%arg0: i32, %arg1: memref<4x8x32xf32, #tpu.memory_space<vmem>>, %arg2: memref<4x8x32xf32, #tpu.memory_space<vmem>>, %arg3: memref<4x8x32xf32, #tpu.memory_space<vmem>>, %arg4: memref<4x8x8xf32, #tpu.memory_space<vmem>>, %arg5: memref<4x8x32xf32, #tpu.memory_space<vmem>>) attributes {dimension_semantics = [#tpu.dimension_semantics<parallel>], iteration_bounds = array<i64: 1>, scalar_prefetch = 0 : i64, scratch_operands = 0 : i64, tpu.core_type = #tpu.core_type<tc>, window_params = [{transform_indices = @transform_0, window_bounds = array<i64: 4, 8, 32>}, {transform_indices = @transform_1, window_bounds = array<i64: 4, 8, 32>}, {transform_indices = @transform_2, window_bounds = array<i64: 4, 8, 32>}, {transform_indices = @transform_3, window_bounds = array<i64: 4, 8, 8>}, {transform_indices = @transform_4, window_bounds = array<i64: 4, 8, 32>}]} {
    %c0 = arith.constant 0 : index
    %c0_0 = arith.constant 0 : index
    %c0_1 = arith.constant 0 : index
    %0 = vector.load %arg1[%c0, %c0_0, %c0_1] : memref<4x8x32xf32, #tpu.memory_space<vmem>>, vector<4x8x32xf32>
    %c0_2 = arith.constant 0 : index
    %c0_3 = arith.constant 0 : index
    %c0_4 = arith.constant 0 : index
    %1 = vector.load %arg2[%c0_2, %c0_3, %c0_4] : memref<4x8x32xf32, #tpu.memory_space<vmem>>, vector<4x8x32xf32>
    %c0_5 = arith.constant 0 : index
    %c0_6 = arith.constant 0 : index
    %c0_7 = arith.constant 0 : index
    %2 = vector.load %arg3[%c0_5, %c0_6, %c0_7] : memref<4x8x32xf32, #tpu.memory_space<vmem>>, vector<4x8x32xf32>
    %cst = arith.constant 1.000000e+00 : f32
    %3 = vector.broadcast %cst : f32 to vector<4x8x32xf32>
    %4 = arith.mulf %0, %3 : vector<4x8x32xf32>
    "tpu.trace_start"() <{level = 10 : i32, message = "gqd,gkd->gqk"}> : () -> ()
    %cst_8 = arith.constant dense<0.000000e+00> : vector<4x8x8xf32>
    %5 = tpu.matmul %4, %1, %cst_8 {dimension_numbers = #tpu.dot_dimension_numbers<[2], [2], [1], [1], [0, 0, 0, 1, 1, 1], [0], [0]>} : vector<4x8x32xf32>, vector<4x8x32xf32>, vector<4x8x8xf32> -> vector<4x8x8xf32>
    "tpu.trace_stop"() : () -> ()
    %cst_9 = arith.constant dense<0xFF800000> : vector<4x8xf32>
    %6 = vector.multi_reduction <maximumf>, %5, %cst_9 [2] : vector<4x8x8xf32> to vector<4x8xf32>
    %7 = vector.shape_cast %6 : vector<4x8xf32> to vector<4x8x1xf32>
    %8 = vector.broadcast %7 : vector<4x8x1xf32> to vector<4x8x8xf32>
    %9 = arith.subf %5, %8 : vector<4x8x8xf32>
    %10 = math.exp %9 : vector<4x8x8xf32>
    %cst_10 = arith.constant dense<0.000000e+00> : vector<4x8xf32>
    %11 = vector.multi_reduction <add>, %10, %cst_10 [2] : vector<4x8x8xf32> to vector<4x8xf32>
    %12 = vector.shape_cast %11 : vector<4x8xf32> to vector<4x8x1xf32>
    "tpu.trace_start"() <{level = 10 : i32, message = "gqk,gkd->gqd"}> : () -> ()
    %cst_11 = arith.constant dense<0.000000e+00> : vector<4x8x32xf32>
    %13 = tpu.matmul %10, %2, %cst_11 {dimension_numbers = #tpu.dot_dimension_numbers<[2], [1], [1], [2], [0, 0, 0, 1, 1, 2], [0], [0]>} : vector<4x8x8xf32>, vector<4x8x32xf32>, vector<4x8x32xf32> -> vector<4x8x32xf32>
    "tpu.trace_stop"() : () -> ()
    %cst_12 = arith.constant 1.000000e+00 : f32
    %14 = vector.broadcast %cst_12 : f32 to vector<4x8x1xf32>
    %15 = arith.divf %14, %12 : vector<4x8x1xf32>
    %16 = vector.broadcast %15 : vector<4x8x1xf32> to vector<4x8x32xf32>
    %17 = arith.mulf %13, %16 : vector<4x8x32xf32>
    %c0_13 = arith.constant 0 : index
    %c0_14 = arith.constant 0 : index
    %c0_15 = arith.constant 0 : index
    %18 = vector.load %arg5[%c0_13, %c0_14, %c0_15] : memref<4x8x32xf32, #tpu.memory_space<vmem>>, vector<4x8x32xf32>
    tpu.vector_store %arg5[%c0_13, %c0_14, %c0_15], %17 {strides = array<i32>} : memref<4x8x32xf32, #tpu.memory_space<vmem>>, vector<4x8x32xf32>,
    return
  }
  func.func @transform_0(%arg0: i32) -> (i32, i32, i32) {
    %c0_i32 = arith.constant 0 : i32
    %c0_i32_0 = arith.constant 0 : i32
    %c0_i32_1 = arith.constant 0 : i32
    return %arg0, %c0_i32, %c0_i32_0 : i32, i32, i32
  }
  func.func @transform_1(%arg0: i32) -> (i32, i32, i32) {
    %c0_i32 = arith.constant 0 : i32
    %c0_i32_0 = arith.constant 0 : i32
    %c0_i32_1 = arith.constant 0 : i32
    return %arg0, %c0_i32, %c0_i32_0 : i32, i32, i32
  }
  func.func @transform_2(%arg0: i32) -> (i32, i32, i32) {
    %c0_i32 = arith.constant 0 : i32
    %c0_i32_0 = arith.constant 0 : i32
    %c0_i32_1 = arith.constant 0 : i32
    return %arg0, %c0_i32, %c0_i32_0 : i32, i32, i32
  }
  func.func @transform_3(%arg0: i32) -> (i32, i32, i32) {
    %c0_i32 = arith.constant 0 : i32
    %c0_i32_0 = arith.constant 0 : i32
    %c0_i32_1 = arith.constant 0 : i32
    return %arg0, %c0_i32, %c0_i32_0 : i32, i32, i32
  }
  func.func @transform_4(%arg0: i32) -> (i32, i32, i32) {
    %c0_i32 = arith.constant 0 : i32
    %c0_i32_0 = arith.constant 0 : i32
    %c0_i32_1 = arith.constant 0 : i32
    return %arg0, %c0_i32, %c0_i32_0 : i32, i32, i32
  }
}

</mosaic_0001>

<llo_original>
// kernel: tpu_custom_call.1
$region0: #{tpu_custom_call.1}
  #allocation0 [shape = 'u32[]', space=smem, size = 0x4, offset = 0x4, fixed_abs, tag = 'smem constant byte address 0x4 - core index']
  #allocation1 [shape = 'u32[144,128]{1,0:T(1,128)}', space=vmem, size = 0x12000, scoped, tag = 'internal scratch']
  %s0 = inlined_call_operand.hbm [shape: f32[4,8,32], index: 0, kind: input, shape index: {}]
  %s1 = inlined_call_operand.hbm [shape: f32[4,8,32], index: 1, kind: input, shape index: {}]
  %s2 = inlined_call_operand.hbm [shape: f32[4,8,32], index: 2, kind: input, shape index: {}]
  %s3 = inlined_call_operand.hbm [shape: f32[4,8,8], index: 3, kind: input, shape index: {}]
  %s4 = inlined_call_operand.hbm [shape: f32[4,8,32], index: 4, kind: output, shape index: {}]
  %s5 = sld [smem:[#allocation0]]
  $region42: #{tpu_custom_call.1} parent=0
    _
  %s7 = ssub.s32 1, %s5
  %s8 = scalar_select 0, %s7, %s5
  $region1: #{tpu_custom_call.1} parent=0
    #allocation2 [shape = 'u8[16384]{0}', space=vmem, size = 0x4000, scoped, tag = 'input window, operand 0, single buffered']
    #allocation3 [shape = 's32[1]{0}', space=sflag, size = 0x4, scoped, tag = 'scoped memory for tpu_custom_call.1']
    #allocation4 [shape = 's32[1]{0}', space=sflag, size = 0x4, scoped, tag = 'scoped memory for tpu_custom_call.1']
    #allocation5 [shape = 'u8[16384]{0}', space=vmem, size = 0x4000, scoped, tag = 'input window, operand 1, single buffered']
    #allocation6 [shape = 's32[1]{0}', space=sflag, size = 0x4, scoped, tag = 'scoped memory for tpu_custom_call.1']
    #allocation7 [shape = 'u8[16384]{0}', space=vmem, size = 0x4000, scoped, tag = 'input window, operand 2, single buffered']
    #allocation8 [shape = 'u8[16384]{0}', space=vmem, size = 0x4000, scoped, tag = 'input window, operand 3, single buffered']
    #allocation9 [shape = 's32[1]{0}', space=sflag, size = 0x4, scoped, tag = 'scoped memory for tpu_custom_call.1']
    #allocation10 [shape = 'u8[16384]{0}', space=vmem, size = 0x4000, scoped, tag = 'output window, operand 0, single buffered']
    %9 = vsyncpa [#allocation3], 0
    %10 = vsyncpa [#allocation6], 0
    %11 = vsyncpa [#allocation9], 0
    %12 = vsyncpa [#allocation4], 0
    // Predicated region
    $region2: #{tpu_custom_call.1} parent=1 // pred_check
      _
    $region3: #{tpu_custom_call.1} parent=1 // pred_check_branch
      %14 = sbr.rel (0) target = $region5
    $region4: #{tpu_custom_call.1} parent=1 // pred_region
      %s16 = ssub.s32 512, 512
      %17 = vsyncadd [#allocation3], %s16
      %s18 = sshll.u32 [#allocation2], 4
      %s19 = int_to_ptr.vmem [resolvable:$true] %s18
      %24 = dma.hbm_to_vmem [thread:$0]  %s0, 512, %s19, [#allocation3], 128, 128, 8
    $region5: #{tpu_custom_call.1} parent=1 // pred_fallthru
      _
    // Predicated region
    $region6: #{tpu_custom_call.1} parent=1 // pred_check
      _
    $region7: #{tpu_custom_call.1} parent=1 // pred_check_branch
      %26 = sbr.rel (0) target = $region9
    $region8: #{tpu_custom_call.1} parent=1 // pred_region
      %s28 = ssub.s32 512, 512
      %29 = vsyncadd [#allocation6], %s28
      %s30 = sshll.u32 [#allocation5], 4
      %s31 = int_to_ptr.vmem [resolvable:$true] %s30
      %36 = dma.hbm_to_vmem [thread:$0]  %s1, 512, %s31, [#allocation6], 128, 128, 8
    $region9: #{tpu_custom_call.1} parent=1 // pred_fallthru
      _
    // Predicated region
    $region10: #{tpu_custom_call.1} parent=1 // pred_check
      _
    $region11: #{tpu_custom_call.1} parent=1 // pred_check_branch
      %38 = sbr.rel (0) target = $region13
    $region12: #{tpu_custom_call.1} parent=1 // pred_region
      %s40 = ssub.s32 512, 512
      %41 = vsyncadd [#allocation6], %s40
      %s42 = sshll.u32 [#allocation7], 4
      %s43 = int_to_ptr.vmem [resolvable:$true] %s42
      %48 = dma.hbm_to_vmem [thread:$0]  %s2, 512, %s43, [#allocation6], 128, 128, 8
    $region13: #{tpu_custom_call.1} parent=1 // pred_fallthru
      _
    // Predicated region
    $region14: #{tpu_custom_call.1} parent=1 // pred_check
      _
    $region15: #{tpu_custom_call.1} parent=1 // pred_check_branch
      %50 = sbr.rel (0) target = $region17
    $region16: #{tpu_custom_call.1} parent=1 // pred_region
      %s52 = ssub.s32 512, 512
      %53 = vsyncadd [#allocation9], %s52
      %s54 = sshll.u32 [#allocation8], 4
      %s55 = int_to_ptr.vmem [resolvable:$true] %s54
      %60 = dma.hbm_to_vmem [thread:$0]  %s3, 512, %s55, [#allocation9], 128, 128, 8
    $region17: #{tpu_custom_call.1} parent=1 // pred_fallthru
      _
    // Predicated region
    $region18: #{tpu_custom_call.1} parent=1 // pred_check
      _
    $region19: #{tpu_custom_call.1} parent=1 // pred_check_branch
      %62 = sbr.rel (0) target = $region21
    $region20: #{tpu_custom_call.1} parent=1 // pred_region
      %63 = dma.done [#allocation3], 512
    $region21: #{tpu_custom_call.1} parent=1 // pred_fallthru
      _
    // Predicated region
    $region22: #{tpu_custom_call.1} parent=1 // pred_check
      _
    $region23: #{tpu_custom_call.1} parent=1 // pred_check_branch
      %65 = sbr.rel (0) target = $region25
    $region24: #{tpu_custom_call.1} parent=1 // pred_region
      %66 = dma.done [#allocation6], 512
    $region25: #{tpu_custom_call.1} parent=1 // pred_fallthru
      _
    // Predicated region
    $region26: #{tpu_custom_call.1} parent=1 // pred_check
      _
    $region27: #{tpu_custom_call.1} parent=1 // pred_check_branch
      %68 = sbr.rel (0) target = $region29
    $region28: #{tpu_custom_call.1} parent=1 // pred_region
      %69 = dma.done [#allocation6], 512
    $region29: #{tpu_custom_call.1} parent=1 // pred_fallthru
      _
    // Predicated region
    $region30: #{tpu_custom_call.1} parent=1 // pred_check
      _
    $region31: #{tpu_custom_call.1} parent=1 // pred_check_branch
      %71 = sbr.rel (0) target = $region33
    $region32: #{tpu_custom_call.1} parent=1 // pred_region
      %72 = dma.done [#allocation9], 512
    $region33: #{tpu_custom_call.1} parent=1 // pred_fallthru
      _
    %v73 = vld [vmem:[#allocation2] sm:$0xff]
    %v74 = vld [vmem:[#allocation2 + $0x8] sm:$0xff]
    %v75 = vld [vmem:[#allocation2 + $0x10] sm:$0xff]
    %v76 = vld [vmem:[#allocation2 + $0x18] sm:$0xff]
    %v77 = vld [vmem:[#allocation5] sm:$0xff]
    %v78 = vld [vmem:[#allocation5 + $0x8] sm:$0xff]
    %v79 = vld [vmem:[#allocation5 + $0x10] sm:$0xff]
    %v80 = vld [vmem:[#allocation5 + $0x18] sm:$0xff]
    %v81 = vld [vmem:[#allocation7] sm:$0xff]
    %v82 = vld [vmem:[#allocation7 + $0x8] sm:$0xff]
    %v83 = vld [vmem:[#allocation7 + $0x10] sm:$0xff]
    %v84 = vld [vmem:[#allocation7 + $0x18] sm:$0xff]
    %vm85 = vcmask 261120
    %v87 = vsel %vm85, %v73, 0
    %v90 = vsel %vm85, %v77, 0
    %92 = vmatprep.subr.mxu0 0.0
    %93 = vmatpush1.xpose.msra.mxu0 %v90
    %94 = vmatprep.subr.mxu0 0.0
    %95 = vmatpush1.xpose.msra.mxu0 0.0
    %96 = vmatprep.subr.mxu0 0.0
    %97 = vmatpush1.xpose.msra.mxu0 0.0
    %98 = vmatprep.subr.mxu0 0.0
    %99 = vmatpush1.xpose.msra.mxu0 0.0
    %100 = vmatprep.subr.mxu0 0.0
    %101 = vmatpush1.xpose.msra.mxu0 0.0
    %102 = vmatprep.subr.mxu0 0.0
    %103 = vmatpush1.xpose.msra.mxu0 0.0
    %104 = vmatprep.subr.mxu0 0.0
    %105 = vmatpush1.xpose.msra.mxu0 0.0
    %106 = vmatprep.subr.mxu0 0.0
    %107 = vmatpush1.xpose.msra.mxu0 0.0
    %108 = vmatprep.subr.mxu0 0.0
    %109 = vmatpush1.xpose.msra.mxu0 0.0
    %110 = vmatprep.subr.mxu0 0.0
    %111 = vmatpush1.xpose.msra.mxu0 0.0
    %112 = vmatprep.subr.mxu0 0.0
    %113 = vmatpush1.xpose.msra.mxu0 0.0
    %114 = vmatprep.subr.mxu0 0.0
    %115 = vmatpush1.xpose.msra.mxu0 0.0
    %116 = vmatprep.subr.mxu0 0.0
    %117 = vmatpush1.xpose.msra.mxu0 0.0
    %118 = vmatprep.subr.mxu0 0.0
    %119 = vmatpush1.xpose.msra.mxu0 0.0
    %120 = vmatprep.subr.mxu0 0.0
    %121 = vmatpush1.xpose.msra.mxu0 0.0
    %122 = vmatprep.subr.mxu0 0.0
    %123 = vmatpush1.xpose.msra.mxu0 0.0
    %124 = vmatprep.subr.mxu0 0.0
    %125 = vmatpush1.xpose.msra.mxu0 0.0
    %126 = vmatprep.subr.mxu0 0.0
    %127 = vmatpush1.xpose.msra.mxu0 0.0
    %128 = vmatprep.subr.mxu0 0.0
    %129 = vmatpush1.xpose.msra.mxu0 0.0
    %130 = vmatprep.subr.mxu0 0.0
    %131 = vmatpush1.xpose.msra.mxu0 0.0
    %132 = vmatprep.subr.mxu0 0.0
    %133 = vmatpush1.xpose.msra.mxu0 0.0
    %134 = vmatprep.subr.mxu0 0.0
    %135 = vmatpush1.xpose.msra.mxu0 0.0
    %136 = vmatprep.subr.mxu0 0.0
    %137 = vmatpush1.xpose.msra.mxu0 0.0
    %138 = vmatprep.subr.mxu0 0.0
    %139 = vmatpush1.xpose.msra.mxu0 0.0
    %140 = vmatprep.subr.mxu0 0.0
    %141 = vmatpush1.xpose.msra.mxu0 0.0
    %142 = vmatprep.subr.mxu0 0.0
    %143 = vmatpush1.xpose.msra.mxu0 0.0
    %144 = vmatprep.subr.mxu0 0.0
    %145 = vmatpush1.xpose.msra.mxu0 0.0
    %146 = vmatprep.subr.mxu0 0.0
    %147 = vmatpush1.xpose.msra.mxu0 0.0
    %148 = vmatprep.subr.mxu0 0.0
    %149 = vmatpush1.xpose.msra.mxu0 0.0
    %150 = vmatprep.subr.mxu0 0.0
    %151 = vmatpush1.xpose.msra.mxu0 0.0
    %152 = vmatprep.subr.mxu0 0.0
    %153 = vmatpush1.xpose.msra.mxu0 0.0
    %154 = vmatprep.subr.mxu0 0.0
    %155 = vmatpush1.xpose.msra.mxu0 0.0
    %156 = vmatprep.mubr.f32.mxu0 0.0
    %157 = vmatmul.mubr.f32.gmra.mrb[0].mxu0 %v87
    %v158 = vpop.f32.mrb[0].mxu0
    %v159 = vadd.f32 0.0, %v158
    %v160 = vpop.f32.mrb[0].mxu0
    %161 = vdwg.mxu0
    %v163 = vsel %vm85, %v74, 0
    %v166 = vsel %vm85, %v78, 0
    %168 = vmatprep.subr.mxu0 0.0
    %169 = vmatpush1.xpose.msra.mxu0 %v166
    %170 = vmatprep.subr.mxu0 0.0
    %171 = vmatpush1.xpose.msra.mxu0 0.0
    %172 = vmatprep.subr.mxu0 0.0
    %173 = vmatpush1.xpose.msra.mxu0 0.0
    %174 = vmatprep.subr.mxu0 0.0
    %175 = vmatpush1.xpose.msra.mxu0 0.0
    %176 = vmatprep.subr.mxu0 0.0
    %177 = vmatpush1.xpose.msra.mxu0 0.0
    %178 = vmatprep.subr.mxu0 0.0
    %179 = vmatpush1.xpose.msra.mxu0 0.0
    %180 = vmatprep.subr.mxu0 0.0
    %181 = vmatpush1.xpose.msra.mxu0 0.0
    %182 = vmatprep.subr.mxu0 0.0
    %183 = vmatpush1.xpose.msra.mxu0 0.0
    %184 = vmatprep.subr.mxu0 0.0
    %185 = vmatpush1.xpose.msra.mxu0 0.0
    %186 = vmatprep.subr.mxu0 0.0
    %187 = vmatpush1.xpose.msra.mxu0 0.0
    %188 = vmatprep.subr.mxu0 0.0
    %189 = vmatpush1.xpose.msra.mxu0 0.0
    %190 = vmatprep.subr.mxu0 0.0
    %191 = vmatpush1.xpose.msra.mxu0 0.0
    %192 = vmatprep.subr.mxu0 0.0
    %193 = vmatpush1.xpose.msra.mxu0 0.0
    %194 = vmatprep.subr.mxu0 0.0
    %195 = vmatpush1.xpose.msra.mxu0 0.0
    %196 = vmatprep.subr.mxu0 0.0
    %197 = vmatpush1.xpose.msra.mxu0 0.0
    %198 = vmatprep.subr.mxu0 0.0
    %199 = vmatpush1.xpose.msra.mxu0 0.0
    %200 = vmatprep.subr.mxu0 0.0
    %201 = vmatpush1.xpose.msra.mxu0 0.0
    %202 = vmatprep.subr.mxu0 0.0
    %203 = vmatpush1.xpose.msra.mxu0 0.0
    %204 = vmatprep.subr.mxu0 0.0
    %205 = vmatpush1.xpose.msra.mxu0 0.0
    %206 = vmatprep.subr.mxu0 0.0
    %207 = vmatpush1.xpose.msra.mxu0 0.0
    %208 = vmatprep.subr.mxu0 0.0
    %209 = vmatpush1.xpose.msra.mxu0 0.0
    %210 = vmatprep.subr.mxu0 0.0
    %211 = vmatpush1.xpose.msra.mxu0 0.0
    %212 = vmatprep.subr.mxu0 0.0
    %213 = vmatpush1.xpose.msra.mxu0 0.0
    %214 = vmatprep.subr.mxu0 0.0
    %215 = vmatpush1.xpose.msra.mxu0 0.0
    %216 = vmatprep.subr.mxu0 0.0
    %217 = vmatpush1.xpose.msra.mxu0 0.0
    %218 = vmatprep.subr.mxu0 0.0
    %219 = vmatpush1.xpose.msra.mxu0 0.0
    %220 = vmatprep.subr.mxu0 0.0
    %221 = vmatpush1.xpose.msra.mxu0 0.0
    %222 = vmatprep.subr.mxu0 0.0
    %223 = vmatpush1.xpose.msra.mxu0 0.0
    %224 = vmatprep.subr.mxu0 0.0
    %225 = vmatpush1.xpose.msra.mxu0 0.0
    %226 = vmatprep.subr.mxu0 0.0
    %227 = vmatpush1.xpose.msra.mxu0 0.0
    %228 = vmatprep.subr.mxu0 0.0
    %229 = vmatpush1.xpose.msra.mxu0 0.0
    %230 = vmatprep.subr.mxu0 0.0
    %231 = vmatpush1.xpose.msra.mxu0 0.0
    %232 = vmatprep.mubr.f32.mxu0 0.0
    %233 = vmatmul.mubr.f32.gmra.mrb[0].mxu0 %v163
    %v234 = vpop.f32.mrb[0].mxu0
    %v235 = vadd.f32 0.0, %v234
    %v236 = vpop.f32.mrb[0].mxu0
    %237 = vdwg.mxu0
    %v239 = vsel %vm85, %v75, 0
    %v242 = vsel %vm85, %v79, 0
    %244 = vmatprep.subr.mxu0 0.0
    %245 = vmatpush1.xpose.msra.mxu0 %v242
    %246 = vmatprep.subr.mxu0 0.0
    %247 = vmatpush1.xpose.msra.mxu0 0.0
    %248 = vmatprep.subr.mxu0 0.0
    %249 = vmatpush1.xpose.msra.mxu0 0.0
    %250 = vmatprep.subr.mxu0 0.0
    %251 = vmatpush1.xpose.msra.mxu0 0.0
    %252 = vmatprep.subr.mxu0 0.0
    %253 = vmatpush1.xpose.msra.mxu0 0.0
    %254 = vmatprep.subr.mxu0 0.0
    %255 = vmatpush1.xpose.msra.mxu0 0.0
    %256 = vmatprep.subr.mxu0 0.0
    %257 = vmatpush1.xpose.msra.mxu0 0.0
    %258 = vmatprep.subr.mxu0 0.0
    %259 = vmatpush1.xpose.msra.mxu0 0.0
    %260 = vmatprep.subr.mxu0 0.0
    %261 = vmatpush1.xpose.msra.mxu0 0.0
    %262 = vmatprep.subr.mxu0 0.0
    %263 = vmatpush1.xpose.msra.mxu0 0.0
    %264 = vmatprep.subr.mxu0 0.0
    %265 = vmatpush1.xpose.msra.mxu0 0.0
    %266 = vmatprep.subr.mxu0 0.0
    %267 = vmatpush1.xpose.msra.mxu0 0.0
    %268 = vmatprep.subr.mxu0 0.0
    %269 = vmatpush1.xpose.msra.mxu0 0.0
    %270 = vmatprep.subr.mxu0 0.0
    %271 = vmatpush1.xpose.msra.mxu0 0.0
    %272 = vmatprep.subr.mxu0 0.0
    %273 = vmatpush1.xpose.msra.mxu0 0.0
    %274 = vmatprep.subr.mxu0 0.0
    %275 = vmatpush1.xpose.msra.mxu0 0.0
    %276 = vmatprep.subr.mxu0 0.0
    %277 = vmatpush1.xpose.msra.mxu0 0.0
    %278 = vmatprep.subr.mxu0 0.0
    %279 = vmatpush1.xpose.msra.mxu0 0.0
    %280 = vmatprep.subr.mxu0 0.0
    %281 = vmatpush1.xpose.msra.mxu0 0.0
    %282 = vmatprep.subr.mxu0 0.0
    %283 = vmatpush1.xpose.msra.mxu0 0.0
    %284 = vmatprep.subr.mxu0 0.0
    %285 = vmatpush1.xpose.msra.mxu0 0.0
    %286 = vmatprep.subr.mxu0 0.0
    %287 = vmatpush1.xpose.msra.mxu0 0.0
    %288 = vmatprep.subr.mxu0 0.0
    %289 = vmatpush1.xpose.msra.mxu0 0.0
    %290 = vmatprep.subr.mxu0 0.0
    %291 = vmatpush1.xpose.msra.mxu0 0.0
    %292 = vmatprep.subr.mxu0 0.0
    %293 = vmatpush1.xpose.msra.mxu0 0.0
    %294 = vmatprep.subr.mxu0 0.0
    %295 = vmatpush1.xpose.msra.mxu0 0.0
    %296 = vmatprep.subr.mxu0 0.0
    %297 = vmatpush1.xpose.msra.mxu0 0.0
    %298 = vmatprep.subr.mxu0 0.0
    %299 = vmatpush1.xpose.msra.mxu0 0.0
    %300 = vmatprep.subr.mxu0 0.0
    %301 = vmatpush1.xpose.msra.mxu0 0.0
    %302 = vmatprep.subr.mxu0 0.0
    %303 = vmatpush1.xpose.msra.mxu0 0.0
    %304 = vmatprep.subr.mxu0 0.0
    %305 = vmatpush1.xpose.msra.mxu0 0.0
    %306 = vmatprep.subr.mxu0 0.0
    %307 = vmatpush1.xpose.msra.mxu0 0.0
    %308 = vmatprep.mubr.f32.mxu0 0.0
    %309 = vmatmul.mubr.f32.gmra.mrb[0].mxu0 %v239
    %v310 = vpop.f32.mrb[0].mxu0
    %v311 = vadd.f32 0.0, %v310
    %v312 = vpop.f32.mrb[0].mxu0
    %313 = vdwg.mxu0
    %v315 = vsel %vm85, %v76, 0
    %v318 = vsel %vm85, %v80, 0
    %320 = vmatprep.subr.mxu0 0.0
    %321 = vmatpush1.xpose.msra.mxu0 %v318
    %322 = vmatprep.subr.mxu0 0.0
    %323 = vmatpush1.xpose.msra.mxu0 0.0
    %324 = vmatprep.subr.mxu0 0.0
    %325 = vmatpush1.xpose.msra.mxu0 0.0
    %326 = vmatprep.subr.mxu0 0.0
    %327 = vmatpush1.xpose.msra.mxu0 0.0
    %328 = vmatprep.subr.mxu0 0.0
    %329 = vmatpush1.xpose.msra.mxu0 0.0
    %330 = vmatprep.subr.mxu0 0.0
    %331 = vmatpush1.xpose.msra.mxu0 0.0
    %332 = vmatprep.subr.mxu0 0.0
    %333 = vmatpush1.xpose.msra.mxu0 0.0
    %334 = vmatprep.subr.mxu0 0.0
    %335 = vmatpush1.xpose.msra.mxu0 0.0
    %336 = vmatprep.subr.mxu0 0.0
    %337 = vmatpush1.xpose.msra.mxu0 0.0
    %338 = vmatprep.subr.mxu0 0.0
    %339 = vmatpush1.xpose.msra.mxu0 0.0
    %340 = vmatprep.subr.mxu0 0.0
    %341 = vmatpush1.xpose.msra.mxu0 0.0
    %342 = vmatprep.subr.mxu0 0.0
    %343 = vmatpush1.xpose.msra.mxu0 0.0
    %344 = vmatprep.subr.mxu0 0.0
    %345 = vmatpush1.xpose.msra.mxu0 0.0
    %346 = vmatprep.subr.mxu0 0.0
    %347 = vmatpush1.xpose.msra.mxu0 0.0
    %348 = vmatprep.subr.mxu0 0.0
    %349 = vmatpush1.xpose.msra.mxu0 0.0
    %350 = vmatprep.subr.mxu0 0.0
    %351 = vmatpush1.xpose.msra.mxu0 0.0
    %352 = vmatprep.subr.mxu0 0.0
    %353 = vmatpush1.xpose.msra.mxu0 0.0
    %354 = vmatprep.subr.mxu0 0.0
    %355 = vmatpush1.xpose.msra.mxu0 0.0
    %356 = vmatprep.subr.mxu0 0.0
    %357 = vmatpush1.xpose.msra.mxu0 0.0
    %358 = vmatprep.subr.mxu0 0.0
    %359 = vmatpush1.xpose.msra.mxu0 0.0
    %360 = vmatprep.subr.mxu0 0.0
    %361 = vmatpush1.xpose.msra.mxu0 0.0
    %362 = vmatprep.subr.mxu0 0.0
    %363 = vmatpush1.xpose.msra.mxu0 0.0
    %364 = vmatprep.subr.mxu0 0.0
    %365 = vmatpush1.xpose.msra.mxu0 0.0
    %366 = vmatprep.subr.mxu0 0.0
    %367 = vmatpush1.xpose.msra.mxu0 0.0
    %368 = vmatprep.subr.mxu0 0.0
    %369 = vmatpush1.xpose.msra.mxu0 0.0
    %370 = vmatprep.subr.mxu0 0.0
    %371 = vmatpush1.xpose.msra.mxu0 0.0
    %372 = vmatprep.subr.mxu0 0.0
    %373 = vmatpush1.xpose.msra.mxu0 0.0
    %374 = vmatprep.subr.mxu0 0.0
    %375 = vmatpush1.xpose.msra.mxu0 0.0
    %376 = vmatprep.subr.mxu0 0.0
    %377 = vmatpush1.xpose.msra.mxu0 0.0
    %378 = vmatprep.subr.mxu0 0.0
    %379 = vmatpush1.xpose.msra.mxu0 0.0
    %380 = vmatprep.subr.mxu0 0.0
    %381 = vmatpush1.xpose.msra.mxu0 0.0
    %382 = vmatprep.subr.mxu0 0.0
    %383 = vmatpush1.xpose.msra.mxu0 0.0
    %384 = vmatprep.mubr.f32.mxu0 0.0
    %385 = vmatmul.mubr.f32.gmra.mrb[0].mxu0 %v315
    %v386 = vpop.f32.mrb[0].mxu0
    %v387 = vadd.f32 0.0, %v386
    %v388 = vpop.f32.mrb[0].mxu0
    %389 = vdwg.mxu0
    %vm390 = vcmask 64512
    %v391 = vsel %vm390, %v159, -inf
    %392 = vmax.xlane.f32.xlu0 %v391
    %v393 = vpop.xlane.xlu0 %392
    %v394 = vsel %vm390, %v235, -inf
    %395 = vmax.xlane.f32.xlu0 %v394
    %v396 = vpop.xlane.xlu0 %395
    %v397 = vsel %vm390, %v311, -inf
    %398 = vmax.xlane.f32.xlu0 %v397
    %v399 = vpop.xlane.xlu0 %398
    %v400 = vsel %vm390, %v387, -inf
    %401 = vmax.xlane.f32.xlu0 %v400
    %v402 = vpop.xlane.xlu0 %401
    %v403 = vsub.f32 %v159, %v393
    %v404 = vsub.f32 %v235, %v396
    %v405 = vsub.f32 %v311, %v399
    %v406 = vsub.f32 %v387, %v402
    %v407 = vmul.f32 %v403, 1.442695
    %v408 = vpow.pop %v407
    %v409 = vmul.f32 %v404, 1.442695
    %v410 = vpow.pop %v409
    %v411 = vmul.f32 %v405, 1.442695
    %v412 = vpow.pop %v411
    %v413 = vmul.f32 %v406, 1.442695
    %v414 = vpow.pop %v413
    %v415 = vsel %vm390, %v408, 0.0
    %416 = vadd.xlane.f32.xlu0 %v415
    %v417 = vpop.xlane.xlu0 %416
    %v418 = vsel %vm390, %v410, 0.0
    %419 = vadd.xlane.f32.xlu0 %v418
    %v420 = vpop.xlane.xlu0 %419
    %v421 = vsel %vm390, %v412, 0.0
    %422 = vadd.xlane.f32.xlu0 %v421
    %v423 = vpop.xlane.xlu0 %422
    %v424 = vsel %vm390, %v414, 0.0
    %425 = vadd.xlane.f32.xlu0 %v424
    %v426 = vpop.xlane.xlu0 %425
    %v428 = vsel %vm390, %v408, 0
    %430 = vmatprep.subr.mxu0 0.0
    %431 = vmatpush1.msra.mxu0 %v81
    %432 = vmatprep.subr.mxu0 0.0
    %433 = vmatpush1.msra.mxu0 0.0
    %434 = vmatprep.subr.mxu0 0.0
    %435 = vmatpush1.msra.mxu0 0.0
    %436 = vmatprep.subr.mxu0 0.0
    %437 = vmatpush1.msra.mxu0 0.0
    %438 = vmatprep.subr.mxu0 0.0
    %439 = vmatpush1.msra.mxu0 0.0
    %440 = vmatprep.subr.mxu0 0.0
    %441 = vmatpush1.msra.mxu0 0.0
    %442 = vmatprep.subr.mxu0 0.0
    %443 = vmatpush1.msra.mxu0 0.0
    %444 = vmatprep.subr.mxu0 0.0
    %445 = vmatpush1.msra.mxu0 0.0
    %446 = vmatprep.subr.mxu0 0.0
    %447 = vmatpush1.msra.mxu0 0.0
    %448 = vmatprep.subr.mxu0 0.0
    %449 = vmatpush1.msra.mxu0 0.0
    %450 = vmatprep.subr.mxu0 0.0
    %451 = vmatpush1.msra.mxu0 0.0
    %452 = vmatprep.subr.mxu0 0.0
    %453 = vmatpush1.msra.mxu0 0.0
    %454 = vmatprep.subr.mxu0 0.0
    %455 = vmatpush1.msra.mxu0 0.0
    %456 = vmatprep.subr.mxu0 0.0
    %457 = vmatpush1.msra.mxu0 0.0
    %458 = vmatprep.subr.mxu0 0.0
    %459 = vmatpush1.msra.mxu0 0.0
    %460 = vmatprep.subr.mxu0 0.0
    %461 = vmatpush1.msra.mxu0 0.0
    %462 = vmatprep.subr.mxu0 0.0
    %463 = vmatpush1.msra.mxu0 0.0
    %464 = vmatprep.subr.mxu0 0.0
    %465 = vmatpush1.msra.mxu0 0.0
    %466 = vmatprep.subr.mxu0 0.0
    %467 = vmatpush1.msra.mxu0 0.0
    %468 = vmatprep.subr.mxu0 0.0
    %469 = vmatpush1.msra.mxu0 0.0
    %470 = vmatprep.subr.mxu0 0.0
    %471 = vmatpush1.msra.mxu0 0.0
    %472 = vmatprep.subr.mxu0 0.0
    %473 = vmatpush1.msra.mxu0 0.0
    %474 = vmatprep.subr.mxu0 0.0
    %475 = vmatpush1.msra.mxu0 0.0
    %476 = vmatprep.subr.mxu0 0.0
    %477 = vmatpush1.msra.mxu0 0.0
    %478 = vmatprep.subr.mxu0 0.0
    %479 = vmatpush1.msra.mxu0 0.0
    %480 = vmatprep.subr.mxu0 0.0
    %481 = vmatpush1.msra.mxu0 0.0
    %482 = vmatprep.subr.mxu0 0.0
    %483 = vmatpush1.msra.mxu0 0.0
    %484 = vmatprep.subr.mxu0 0.0
    %485 = vmatpush1.msra.mxu0 0.0
    %486 = vmatprep.subr.mxu0 0.0
    %487 = vmatpush1.msra.mxu0 0.0
    %488 = vmatprep.subr.mxu0 0.0
    %489 = vmatpush1.msra.mxu0 0.0
    %490 = vmatprep.subr.mxu0 0.0
    %491 = vmatpush1.msra.mxu0 0.0
    %492 = vmatprep.subr.mxu0 0.0
    %493 = vmatpush1.msra.mxu0 0.0
    %494 = vmatprep.mubr.f32.mxu0 0.0
    %495 = vmatmul.mubr.f32.gmra.mrb[0].mxu0 %v428
    %v496 = vpop.f32.mrb[0].mxu0
    %v497 = vadd.f32 0.0, %v496
    %v498 = vpop.f32.mrb[0].mxu0
    %499 = vdwg.mxu0
    %v501 = vsel %vm390, %v410, 0
    %503 = vmatprep.subr.mxu0 0.0
    %504 = vmatpush1.msra.mxu0 %v82
    %505 = vmatprep.subr.mxu0 0.0
    %506 = vmatpush1.msra.mxu0 0.0
    %507 = vmatprep.subr.mxu0 0.0
    %508 = vmatpush1.msra.mxu0 0.0
    %509 = vmatprep.subr.mxu0 0.0
    %510 = vmatpush1.msra.mxu0 0.0
    %511 = vmatprep.subr.mxu0 0.0
    %512 = vmatpush1.msra.mxu0 0.0
    %513 = vmatprep.subr.mxu0 0.0
    %514 = vmatpush1.msra.mxu0 0.0
    %515 = vmatprep.subr.mxu0 0.0
    %516 = vmatpush1.msra.mxu0 0.0
    %517 = vmatprep.subr.mxu0 0.0
    %518 = vmatpush1.msra.mxu0 0.0
    %519 = vmatprep.subr.mxu0 0.0
    %520 = vmatpush1.msra.mxu0 0.0
    %521 = vmatprep.subr.mxu0 0.0
    %522 = vmatpush1.msra.mxu0 0.0
    %523 = vmatprep.subr.mxu0 0.0
    %524 = vmatpush1.msra.mxu0 0.0
    %525 = vmatprep.subr.mxu0 0.0
    %526 = vmatpush1.msra.mxu0 0.0
    %527 = vmatprep.subr.mxu0 0.0
    %528 = vmatpush1.msra.mxu0 0.0
    %529 = vmatprep.subr.mxu0 0.0
    %530 = vmatpush1.msra.mxu0 0.0
    %531 = vmatprep.subr.mxu0 0.0
    %532 = vmatpush1.msra.mxu0 0.0
    %533 = vmatprep.subr.mxu0 0.0
    %534 = vmatpush1.msra.mxu0 0.0
    %535 = vmatprep.subr.mxu0 0.0
    %536 = vmatpush1.msra.mxu0 0.0
    %537 = vmatprep.subr.mxu0 0.0
    %538 = vmatpush1.msra.mxu0 0.0
    %539 = vmatprep.subr.mxu0 0.0
    %540 = vmatpush1.msra.mxu0 0.0
    %541 = vmatprep.subr.mxu0 0.0
    %542 = vmatpush1.msra.mxu0 0.0
    %543 = vmatprep.subr.mxu0 0.0
    %544 = vmatpush1.msra.mxu0 0.0
    %545 = vmatprep.subr.mxu0 0.0
    %546 = vmatpush1.msra.mxu0 0.0
    %547 = vmatprep.subr.mxu0 0.0
    %548 = vmatpush1.msra.mxu0 0.0
    %549 = vmatprep.subr.mxu0 0.0
    %550 = vmatpush1.msra.mxu0 0.0
    %551 = vmatprep.subr.mxu0 0.0
    %552 = vmatpush1.msra.mxu0 0.0
    %553 = vmatprep.subr.mxu0 0.0
    %554 = vmatpush1.msra.mxu0 0.0
    %555 = vmatprep.subr.mxu0 0.0
    %556 = vmatpush1.msra.mxu0 0.0
    %557 = vmatprep.subr.mxu0 0.0
    %558 = vmatpush1.msra.mxu0 0.0
    %559 = vmatprep.subr.mxu0 0.0
    %560 = vmatpush1.msra.mxu0 0.0
    %561 = vmatprep.subr.mxu0 0.0
    %562 = vmatpush1.msra.mxu0 0.0
    %563 = vmatprep.subr.mxu0 0.0
    %564 = vmatpush1.msra.mxu0 0.0
    %565 = vmatprep.subr.mxu0 0.0
    %566 = vmatpush1.msra.mxu0 0.0
    %567 = vmatprep.mubr.f32.mxu0 0.0
    %568 = vmatmul.mubr.f32.gmra.mrb[0].mxu0 %v501
    %v569 = vpop.f32.mrb[0].mxu0
    %v570 = vadd.f32 0.0, %v569
    %v571 = vpop.f32.mrb[0].mxu0
    %572 = vdwg.mxu0
    %v574 = vsel %vm390, %v412, 0
    %576 = vmatprep.subr.mxu0 0.0
    %577 = vmatpush1.msra.mxu0 %v83
    %578 = vmatprep.subr.mxu0 0.0
    %579 = vmatpush1.msra.mxu0 0.0
    %580 = vmatprep.subr.mxu0 0.0
    %581 = vmatpush1.msra.mxu0 0.0
    %582 = vmatprep.subr.mxu0 0.0
    %583 = vmatpush1.msra.mxu0 0.0
    %584 = vmatprep.subr.mxu0 0.0
    %585 = vmatpush1.msra.mxu0 0.0
    %586 = vmatprep.subr.mxu0 0.0
    %587 = vmatpush1.msra.mxu0 0.0
    %588 = vmatprep.subr.mxu0 0.0
    %589 = vmatpush1.msra.mxu0 0.0
    %590 = vmatprep.subr.mxu0 0.0
    %591 = vmatpush1.msra.mxu0 0.0
    %592 = vmatprep.subr.mxu0 0.0
    %593 = vmatpush1.msra.mxu0 0.0
    %594 = vmatprep.subr.mxu0 0.0
    %595 = vmatpush1.msra.mxu0 0.0
    %596 = vmatprep.subr.mxu0 0.0
    %597 = vmatpush1.msra.mxu0 0.0
    %598 = vmatprep.subr.mxu0 0.0
    %599 = vmatpush1.msra.mxu0 0.0
    %600 = vmatprep.subr.mxu0 0.0
    %601 = vmatpush1.msra.mxu0 0.0
    %602 = vmatprep.subr.mxu0 0.0
    %603 = vmatpush1.msra.mxu0 0.0
    %604 = vmatprep.subr.mxu0 0.0
    %605 = vmatpush1.msra.mxu0 0.0
    %606 = vmatprep.subr.mxu0 0.0
    %607 = vmatpush1.msra.mxu0 0.0
    %608 = vmatprep.subr.mxu0 0.0
    %609 = vmatpush1.msra.mxu0 0.0
    %610 = vmatprep.subr.mxu0 0.0
    %611 = vmatpush1.msra.mxu0 0.0
    %612 = vmatprep.subr.mxu0 0.0
    %613 = vmatpush1.msra.mxu0 0.0
    %614 = vmatprep.subr.mxu0 0.0
    %615 = vmatpush1.msra.mxu0 0.0
    %616 = vmatprep.subr.mxu0 0.0
    %617 = vmatpush1.msra.mxu0 0.0
    %618 = vmatprep.subr.mxu0 0.0
    %619 = vmatpush1.msra.mxu0 0.0
    %620 = vmatprep.subr.mxu0 0.0
    %621 = vmatpush1.msra.mxu0 0.0
    %622 = vmatprep.subr.mxu0 0.0
    %623 = vmatpush1.msra.mxu0 0.0
    %624 = vmatprep.subr.mxu0 0.0
    %625 = vmatpush1.msra.mxu0 0.0
    %626 = vmatprep.subr.mxu0 0.0
    %627 = vmatpush1.msra.mxu0 0.0
    %628 = vmatprep.subr.mxu0 0.0
    %629 = vmatpush1.msra.mxu0 0.0
    %630 = vmatprep.subr.mxu0 0.0
    %631 = vmatpush1.msra.mxu0 0.0
    %632 = vmatprep.subr.mxu0 0.0
    %633 = vmatpush1.msra.mxu0 0.0
    %634 = vmatprep.subr.mxu0 0.0
    %635 = vmatpush1.msra.mxu0 0.0
    %636 = vmatprep.subr.mxu0 0.0
    %637 = vmatpush1.msra.mxu0 0.0
    %638 = vmatprep.subr.mxu0 0.0
    %639 = vmatpush1.msra.mxu0 0.0
    %640 = vmatprep.mubr.f32.mxu0 0.0
    %641 = vmatmul.mubr.f32.gmra.mrb[0].mxu0 %v574
    %v642 = vpop.f32.mrb[0].mxu0
    %v643 = vadd.f32 0.0, %v642
    %v644 = vpop.f32.mrb[0].mxu0
    %645 = vdwg.mxu0
    %v647 = vsel %vm390, %v414, 0
    %649 = vmatprep.subr.mxu0 0.0
    %650 = vmatpush1.msra.mxu0 %v84
    %651 = vmatprep.subr.mxu0 0.0
    %652 = vmatpush1.msra.mxu0 0.0
    %653 = vmatprep.subr.mxu0 0.0
    %654 = vmatpush1.msra.mxu0 0.0
    %655 = vmatprep.subr.mxu0 0.0
    %656 = vmatpush1.msra.mxu0 0.0
    %657 = vmatprep.subr.mxu0 0.0
    %658 = vmatpush1.msra.mxu0 0.0
    %659 = vmatprep.subr.mxu0 0.0
    %660 = vmatpush1.msra.mxu0 0.0
    %661 = vmatprep.subr.mxu0 0.0
    %662 = vmatpush1.msra.mxu0 0.0
    %663 = vmatprep.subr.mxu0 0.0
    %664 = vmatpush1.msra.mxu0 0.0
    %665 = vmatprep.subr.mxu0 0.0
    %666 = vmatpush1.msra.mxu0 0.0
    %667 = vmatprep.subr.mxu0 0.0
    %668 = vmatpush1.msra.mxu0 0.0
    %669 = vmatprep.subr.mxu0 0.0
    %670 = vmatpush1.msra.mxu0 0.0
    %671 = vmatprep.subr.mxu0 0.0
    %672 = vmatpush1.msra.mxu0 0.0
    %673 = vmatprep.subr.mxu0 0.0
    %674 = vmatpush1.msra.mxu0 0.0
    %675 = vmatprep.subr.mxu0 0.0
    %676 = vmatpush1.msra.mxu0 0.0
    %677 = vmatprep.subr.mxu0 0.0
    %678 = vmatpush1.msra.mxu0 0.0
    %679 = vmatprep.subr.mxu0 0.0
    %680 = vmatpush1.msra.mxu0 0.0
    %681 = vmatprep.subr.mxu0 0.0
    %682 = vmatpush1.msra.mxu0 0.0
    %683 = vmatprep.subr.mxu0 0.0
    %684 = vmatpush1.msra.mxu0 0.0
    %685 = vmatprep.subr.mxu0 0.0
    %686 = vmatpush1.msra.mxu0 0.0
    %687 = vmatprep.subr.mxu0 0.0
    %688 = vmatpush1.msra.mxu0 0.0
    %689 = vmatprep.subr.mxu0 0.0
    %690 = vmatpush1.msra.mxu0 0.0
    %691 = vmatprep.subr.mxu0 0.0
    %692 = vmatpush1.msra.mxu0 0.0
    %693 = vmatprep.subr.mxu0 0.0
    %694 = vmatpush1.msra.mxu0 0.0
    %695 = vmatprep.subr.mxu0 0.0
    %696 = vmatpush1.msra.mxu0 0.0
    %697 = vmatprep.subr.mxu0 0.0
    %698 = vmatpush1.msra.mxu0 0.0
    %699 = vmatprep.subr.mxu0 0.0
    %700 = vmatpush1.msra.mxu0 0.0
    %701 = vmatprep.subr.mxu0 0.0
    %702 = vmatpush1.msra.mxu0 0.0
    %703 = vmatprep.subr.mxu0 0.0
    %704 = vmatpush1.msra.mxu0 0.0
    %705 = vmatprep.subr.mxu0 0.0
    %706 = vmatpush1.msra.mxu0 0.0
    %707 = vmatprep.subr.mxu0 0.0
    %708 = vmatpush1.msra.mxu0 0.0
    %709 = vmatprep.subr.mxu0 0.0
    %710 = vmatpush1.msra.mxu0 0.0
    %711 = vmatprep.subr.mxu0 0.0
    %712 = vmatpush1.msra.mxu0 0.0
    %713 = vmatprep.mubr.f32.mxu0 0.0
    %714 = vmatmul.mubr.f32.gmra.mrb[0].mxu0 %v647
    %v715 = vpop.f32.mrb[0].mxu0
    %v716 = vadd.f32 0.0, %v715
    %v717 = vpop.f32.mrb[0].mxu0
    %718 = vdwg.mxu0
    %v719 = vrcp.pop %v417
    %v720 = vmul.f32 1.0, %v719
    %v721 = vrcp.pop %v420
    %v722 = vmul.f32 1.0, %v721
    %v723 = vrcp.pop %v423
    %v724 = vmul.f32 1.0, %v723
    %v725 = vrcp.pop %v426
    %v726 = vmul.f32 1.0, %v725
    %v727 = vmul.f32 %v497, %v720
    %v728 = vmul.f32 %v570, %v722
    %v729 = vmul.f32 %v643, %v724
    %v730 = vmul.f32 %v716, %v726
    %731 = vst.msk [vmem:[#allocation10] sm:$0xff] %vm85, %v727
    %732 = vst.msk [vmem:[#allocation10 + $0x8] sm:$0xff] %vm85, %v728
    %733 = vst.msk [vmem:[#allocation10 + $0x10] sm:$0xff] %vm85, %v729
    %734 = vst.msk [vmem:[#allocation10 + $0x18] sm:$0xff] %vm85, %v730
    // Predicated region
    $region34: #{tpu_custom_call.1} parent=1 // pred_check
      _
    $region35: #{tpu_custom_call.1} parent=1 // pred_check_branch
      %736 = sbr.rel (0) target = $region37
    $region36: #{tpu_custom_call.1} parent=1 // pred_region
      %s738 = ssub.s32 512, 512
      %739 = vsyncadd [#allocation4], %s738
      %s740 = sshll.u32 [#allocation10], 4
      %s741 = int_to_ptr.vmem [resolvable:$true] %s740
      %746 = dma.vmem_to_hbm [thread:$0]  %s741, 512, %s4, [#allocation4], 128, 128, 8
    $region37: #{tpu_custom_call.1} parent=1 // pred_fallthru
      _
    // Predicated region
    $region38: #{tpu_custom_call.1} parent=1 // pred_check
      _
    $region39: #{tpu_custom_call.1} parent=1 // pred_check_branch
      %748 = sbr.rel (0) target = $region41
    $region40: #{tpu_custom_call.1} parent=1 // pred_region
      %749 = dma.done [#allocation4], 512
    $region41: #{tpu_custom_call.1} parent=1 // pred_fallthru
      _
    %750 = vsyncpa [#allocation3], 1
    %751 = vsyncpa [#allocation6], 1
    %752 = vsyncpa [#allocation9], 1
    %753 = vsyncpa [#allocation4], 1

</llo_original>
